<compile_context>
chip_gen: v7x
topology: tpu7x:2x2x1
jax: 0.10.0
libtpu: 0.0.40
codegen_flags: <defaults>
</compile_context>

<pallas_src>
import functools

import jax
import jax.numpy as jnp
from jax.experimental import pallas as pl
from jax.experimental.pallas import tpu as pltpu


def string_to_digits(draw_str):
    return [int(c) for c in str(draw_str).zfill(6)]


def _digit_embed_kernel(digits_ref, table_t_ref, out_ref, *, seq_len, vocab):
    """One grid step: embed-and-mean a tile of draws.

    digits_ref : VMEM (seq_len, TILE) int32   -- one column (lane) per draw
    table_t_ref: VMEM (dim, vocab)    float32 -- transposed table, grid-resident
    out_ref    : VMEM (dim, TILE)     float32 -- lane-dense output tile
    """
    digits = digits_ref[...]                                  # (seq_len, TILE)
    tile = digits.shape[1]
    vocab_iota = jax.lax.broadcasted_iota(jnp.int32, (vocab, tile), 0)

    # Per-draw digit counts: pure VPU cmp+add over vregs already in registers,
    # tiny static unroll (seq_len == 6 for lottery draws).
    counts = jnp.zeros((vocab, tile), jnp.float32)
    for j in range(seq_len):
        counts = counts + jnp.where(vocab_iota == digits[j:j + 1, :], 1.0, 0.0)
    counts = counts * jnp.float32(1.0 / seq_len)              # one scale per tile

    # (dim, vocab) @ (vocab, TILE) -> (dim, TILE); one small MXU dot per tile,
    # stores are unmasked because TILE is a multiple of 128.
    out_ref[...] = jnp.dot(table_t_ref[...], counts,
                           preferred_element_type=jnp.float32)


@functools.partial(jax.jit, static_argnames=("max_tile",))
def _digit_embedding_batched_impl(digits_batch, table, *, max_tile=1024):
    n, seq_len = digits_batch.shape
    vocab, dim = table.shape

    # Lane-dense draw axis: pad N to a multiple of 128, but never allocate a
    # tile larger than needed (small batches) or larger than max_tile (VMEM).
    n_pad128 = -(-n // 128) * 128
    tile = min(n_pad128, max_tile)
    n_pad = -(-n // tile) * tile

    # Draws on the lane axis; padded columns hold digit 0 (a valid index) and
    # are sliced away below, so there is no OOB / NaN risk.
    digits_t = jnp.zeros((seq_len, n_pad), jnp.int32).at[:, :n].set(
        digits_batch.astype(jnp.int32).T)
    table_t = table.astype(jnp.float32).T                     # (dim, vocab)

    out_t = pl.pallas_call(
        functools.partial(_digit_embed_kernel, seq_len=seq_len, vocab=vocab),
        out_shape=jax.ShapeDtypeStruct((dim, n_pad), jnp.float32),
        grid_spec=pltpu.PrefetchScalarGridSpec(
            num_scalar_prefetch=0,
            grid=(n_pad // tile,),
            in_specs=[
                pl.BlockSpec((seq_len, tile), lambda i: (0, i)),
                pl.BlockSpec((dim, vocab), lambda i: (0, 0)),   # table resident
            ],
            out_specs=pl.BlockSpec((dim, tile), lambda i: (0, i)),
        ),
        compiler_params=pltpu.CompilerParams(
            # Independent draw tiles: shard across TensorCores (v7x megacore).
            dimension_semantics=("parallel",),
        ),
    )(digits_t, table_t)
    return out_t[:, :n].T                                     # (N, dim)


def digit_embedding_forward_batched(digits_batch, table, *, max_tile=1024):
    """digits_batch: int (N, seq); table: (vocab, dim) f32 -> (N, dim) f32."""
    digits_batch = jnp.asarray(digits_batch, dtype=jnp.int32)
    table = jnp.asarray(table, dtype=jnp.float32)
    return _digit_embedding_batched_impl(digits_batch, table, max_tile=max_tile)


def digit_embedding_forward(digits, table):
    """Single draw: digits (seq,) int -> (dim,) float32."""
    # TODO(synk): a truly single draw is launch-bound either way; kept on the
    # Pallas path for parity with the batched kernel.
    digits = jnp.asarray(digits, dtype=jnp.int32)
    return digit_embedding_forward_batched(digits[None, :], table)[0]


class DigitEmbeddingPallas:
    """JAX/Pallas port of the PyTorch DigitEmbedding module."""

    def __init__(self, embedding_dim=16, key=None):
        if key is None:
            key = jax.random.PRNGKey(0)
        # nn.Embedding default init: N(0, 1), shape (10, embedding_dim).
        self.table = jax.random.normal(key, (10, embedding_dim), dtype=jnp.float32)

    def forward(self, digits):
        return digit_embedding_forward(digits, self.table)

    def forward_batch(self, digits_batch, **kw):
        return digit_embedding_forward_batched(digits_batch, self.table, **kw)

    def embed_draw(self, draw_str):
        return self.forward(string_to_digits(draw_str))

    def embed_draws(self, draw_strs):
        return self.forward_batch([string_to_digits(s) for s in draw_strs])

    def fit(self, draws):
        pass


if __name__ == "__main__":
    key = jax.random.PRNGKey(0)
    k_table, k_batch, k_big = jax.random.split(key, 3)

    model = DigitEmbeddingPallas(embedding_dim=16, key=k_table)

    # Single-draw path (original module semantics).
    digits = string_to_digits("123456")  # [1, 2, 3, 4, 5, 6]
    out_single = jax.block_until_ready(model.forward(digits))
    ref_single = jnp.take(
        model.table, jnp.asarray(digits, jnp.int32), axis=0
    ).mean(axis=0)
    assert out_single.shape == (16,)
    assert out_single.dtype == jnp.float32
    assert jnp.allclose(out_single, ref_single, atol=1e-5, rtol=1e-5)

    # Batched path (the throughput path this kernel is optimized for).
    batch = jax.random.randint(k_batch, (8, 6), 0, 10, dtype=jnp.int32)
    out_batch = jax.block_until_ready(model.forward_batch(batch))
    ref_batch = jnp.take(model.table, batch, axis=0).mean(axis=1)
    assert out_batch.shape == (8, 16)
    assert out_batch.dtype == jnp.float32
    assert jnp.allclose(out_batch, ref_batch, atol=1e-5, rtol=1e-5)

    # Multi-tile grid path (forces tile=128, grid=3) to exercise pipelining.
    big = jax.random.randint(k_big, (300, 6), 0, 10, dtype=jnp.int32)
    out_big = jax.block_until_ready(model.forward_batch(big, max_tile=128))
    ref_big = jnp.take(model.table, big, axis=0).mean(axis=1)
    assert out_big.shape == (300, 16)
    assert jnp.allclose(out_big, ref_big, atol=1e-5, rtol=1e-5)

    print("KERNEL_OK")
</pallas_src>

<mosaic_0001>
module attributes {stable_mosaic.version = 11 : i64} {
  func.func @_digit_embed_kernel(%arg0: i32, %arg1: memref<6x128xi32, #tpu.memory_space<vmem>>, %arg2: memref<16x10xf32, #tpu.memory_space<vmem>>, %arg3: memref<16x128xf32, #tpu.memory_space<vmem>>) attributes {dimension_semantics = [#tpu.dimension_semantics<parallel>], iteration_bounds = array<i64: 1>, scalar_prefetch = 0 : i64, scratch_operands = 0 : i64, tpu.core_type = #tpu.core_type<tc>, window_params = [{transform_indices = @transform_0, window_bounds = array<i64: 6, 128>}, {pipeline_mode = #tpu.pipeline_mode<synchronous>, transform_indices = @transform_1, window_bounds = array<i64: 16, 10>}, {transform_indices = @transform_2, window_bounds = array<i64: 16, 128>}]} {
    %c0 = arith.constant 0 : index
    %c0_0 = arith.constant 0 : index
    %0 = vector.load %arg1[%c0, %c0_0] : memref<6x128xi32, #tpu.memory_space<vmem>>, vector<6x128xi32>
    %1 = tpu.iota {dimensions = array<i32: 0>} : vector<10x128xi32>
    %cst = arith.constant 0.000000e+00 : f32
    %2 = vector.broadcast %cst : f32 to vector<10x128xf32>
    %3 = vector.extract_strided_slice %0 {offsets = [0, 0], sizes = [1, 128], strides = [1, 1]} : vector<6x128xi32> to vector<1x128xi32>
    %4 = vector.broadcast %3 : vector<1x128xi32> to vector<10x128xi32>
    %5 = arith.cmpi eq, %1, %4 : vector<10x128xi32>
    %cst_1 = arith.constant 1.000000e+00 : f32
    %cst_2 = arith.constant 0.000000e+00 : f32
    %6 = vector.broadcast %cst_1 : f32 to vector<10x128xf32>
    %7 = vector.broadcast %cst_2 : f32 to vector<10x128xf32>
    %8 = arith.select %5, %6, %7 : vector<10x128xi1>, vector<10x128xf32>
    %9 = arith.addf %2, %8 : vector<10x128xf32>
    %10 = vector.extract_strided_slice %0 {offsets = [1, 0], sizes = [1, 128], strides = [1, 1]} : vector<6x128xi32> to vector<1x128xi32>
    %11 = vector.broadcast %10 : vector<1x128xi32> to vector<10x128xi32>
    %12 = arith.cmpi eq, %1, %11 : vector<10x128xi32>
    %cst_3 = arith.constant 1.000000e+00 : f32
    %cst_4 = arith.constant 0.000000e+00 : f32
    %13 = vector.broadcast %cst_3 : f32 to vector<10x128xf32>
    %14 = vector.broadcast %cst_4 : f32 to vector<10x128xf32>
    %15 = arith.select %12, %13, %14 : vector<10x128xi1>, vector<10x128xf32>
    %16 = arith.addf %9, %15 : vector<10x128xf32>
    %17 = vector.extract_strided_slice %0 {offsets = [2, 0], sizes = [1, 128], strides = [1, 1]} : vector<6x128xi32> to vector<1x128xi32>
    %18 = vector.broadcast %17 : vector<1x128xi32> to vector<10x128xi32>
    %19 = arith.cmpi eq, %1, %18 : vector<10x128xi32>
    %cst_5 = arith.constant 1.000000e+00 : f32
    %cst_6 = arith.constant 0.000000e+00 : f32
    %20 = vector.broadcast %cst_5 : f32 to vector<10x128xf32>
    %21 = vector.broadcast %cst_6 : f32 to vector<10x128xf32>
    %22 = arith.select %19, %20, %21 : vector<10x128xi1>, vector<10x128xf32>
    %23 = arith.addf %16, %22 : vector<10x128xf32>
    %24 = vector.extract_strided_slice %0 {offsets = [3, 0], sizes = [1, 128], strides = [1, 1]} : vector<6x128xi32> to vector<1x128xi32>
    %25 = vector.broadcast %24 : vector<1x128xi32> to vector<10x128xi32>
    %26 = arith.cmpi eq, %1, %25 : vector<10x128xi32>
    %cst_7 = arith.constant 1.000000e+00 : f32
    %cst_8 = arith.constant 0.000000e+00 : f32
    %27 = vector.broadcast %cst_7 : f32 to vector<10x128xf32>
    %28 = vector.broadcast %cst_8 : f32 to vector<10x128xf32>
    %29 = arith.select %26, %27, %28 : vector<10x128xi1>, vector<10x128xf32>
    %30 = arith.addf %23, %29 : vector<10x128xf32>
    %31 = vector.extract_strided_slice %0 {offsets = [4, 0], sizes = [1, 128], strides = [1, 1]} : vector<6x128xi32> to vector<1x128xi32>
    %32 = vector.broadcast %31 : vector<1x128xi32> to vector<10x128xi32>
    %33 = arith.cmpi eq, %1, %32 : vector<10x128xi32>
    %cst_9 = arith.constant 1.000000e+00 : f32
    %cst_10 = arith.constant 0.000000e+00 : f32
    %34 = vector.broadcast %cst_9 : f32 to vector<10x128xf32>
    %35 = vector.broadcast %cst_10 : f32 to vector<10x128xf32>
    %36 = arith.select %33, %34, %35 : vector<10x128xi1>, vector<10x128xf32>
    %37 = arith.addf %30, %36 : vector<10x128xf32>
    %38 = vector.extract_strided_slice %0 {offsets = [5, 0], sizes = [1, 128], strides = [1, 1]} : vector<6x128xi32> to vector<1x128xi32>
    %39 = vector.broadcast %38 : vector<1x128xi32> to vector<10x128xi32>
    %40 = arith.cmpi eq, %1, %39 : vector<10x128xi32>
    %cst_11 = arith.constant 1.000000e+00 : f32
    %cst_12 = arith.constant 0.000000e+00 : f32
    %41 = vector.broadcast %cst_11 : f32 to vector<10x128xf32>
    %42 = vector.broadcast %cst_12 : f32 to vector<10x128xf32>
    %43 = arith.select %40, %41, %42 : vector<10x128xi1>, vector<10x128xf32>
    %44 = arith.addf %37, %43 : vector<10x128xf32>
    %cst_13 = arith.constant 0.166666672 : f32
    %45 = vector.broadcast %cst_13 : f32 to vector<10x128xf32>
    %46 = arith.mulf %44, %45 : vector<10x128xf32>
    %c0_14 = arith.constant 0 : index
    %c0_15 = arith.constant 0 : index
    %47 = vector.load %arg2[%c0_14, %c0_15] : memref<16x10xf32, #tpu.memory_space<vmem>>, vector<16x10xf32>
    %cst_16 = arith.constant dense<0.000000e+00> : vector<16x128xf32>
    %48 = tpu.matmul %47, %46, %cst_16 {dimension_numbers = #tpu.dot_dimension_numbers<[1], [0], [0], [1], [0, 0, 1, 1], [], []>} : vector<16x10xf32>, vector<10x128xf32>, vector<16x128xf32> -> vector<16x128xf32>
    %c0_17 = arith.constant 0 : index
    %c0_18 = arith.constant 0 : index
    %49 = vector.load %arg3[%c0_17, %c0_18] : memref<16x128xf32, #tpu.memory_space<vmem>>, vector<16x128xf32>
    tpu.vector_store %arg3[%c0_17, %c0_18], %48 {strides = array<i32>} : memref<16x128xf32, #tpu.memory_space<vmem>>, vector<16x128xf32>,
    return
  }
  func.func @transform_0(%arg0: i32) -> (i32, i32) {
    %c0_i32 = arith.constant 0 : i32
    %c0_i32_0 = arith.constant 0 : i32
    return %c0_i32, %arg0 : i32, i32
  }
  func.func @transform_1(%arg0: i32) -> (i32, i32) {
    %c0_i32 = arith.constant 0 : i32
    %c0_i32_0 = arith.constant 0 : i32
    %c0_i32_1 = arith.constant 0 : i32
    return %c0_i32, %c0_i32_0 : i32, i32
  }
  func.func @transform_2(%arg0: i32) -> (i32, i32) {
    %c0_i32 = arith.constant 0 : i32
    %c0_i32_0 = arith.constant 0 : i32
    return %c0_i32, %arg0 : i32, i32
  }
}

</mosaic_0001>

<llo_original>
// kernel: _digit_embedding_batched_impl.1
$region0: #{_digit_embedding_batched_impl.1}
  #allocation0 [shape = 'u32[]', space=smem, size = 0x4, offset = 0x4, fixed_abs, tag = 'smem constant byte address 0x4 - core index']
  #allocation1 [shape = 'u32[144,128]{1,0:T(1,128)}', space=vmem, size = 0x12000, scoped, tag = 'internal scratch']
  %s0 = inlined_call_operand.vmem [shape: s32[6,128], index: 0, kind: input, shape index: {}]
  %s1 = inlined_call_operand.vmem [shape: f32[16,10], index: 1, kind: input, shape index: {}]
  %s2 = inlined_call_operand.vmem [shape: f32[16,128], index: 2, kind: output, shape index: {}]
  %s3 = sld [smem:[#allocation0]]
  $region18: #{_digit_embedding_batched_impl.1} parent=0
    _
  %s5 = ssub.s32 1, %s3
  %s6 = scalar_select 0, %s5, %s3
  // Predicated region
  $region2: #{_digit_embedding_batched_impl.1} parent=0 // pred_check
    _
  $region3: #{_digit_embedding_batched_impl.1} parent=0 // pred_check_branch
    %8 = sbr.rel (0) target = $region5
  $region4: #{_digit_embedding_batched_impl.1} parent=0 // pred_region
    _
  $region5: #{_digit_embedding_batched_impl.1} parent=0 // pred_fallthru
    _
  // Predicated region
  $region6: #{_digit_embedding_batched_impl.1} parent=0 // pred_check
    _
  $region7: #{_digit_embedding_batched_impl.1} parent=0 // pred_check_branch
    %10 = sbr.rel (0) target = $region9
  $region8: #{_digit_embedding_batched_impl.1} parent=0 // pred_region
    _
  $region9: #{_digit_embedding_batched_impl.1} parent=0 // pred_fallthru
    _
  %v11 = vld [vmem:[%s0] sm:$0x3f]
  %v12 = vlaneseq
  %v13 = vshrl.u32 %v12, 7
  %v14 = vadd.s32 %v13, 8
  %v15 = vlaneseq
  %v16 = vshrl.u32 %v15, 7
  %v17 = vsub.s32 0, %v16
  %v18 = vrot.slane %v11, %v17
  %vm19 = vcmp.eq.s32.totalorder %v13, %v18
  %vm20 = vcmp.eq.s32.totalorder %v14, %v18
  %v21 = vsel %vm19, 1.0, 0.0
  %v22 = vsel %vm20, 1.0, 0.0
  %v23 = vadd.f32 %v21, 0.0
  %v24 = vadd.f32 %v22, 0.0
  %v25 = vlaneseq
  %v26 = vshrl.u32 %v25, 7
  %v27 = vsub.s32 1, %v26
  %v28 = vrot.slane %v11, %v27
  %vm29 = vcmp.eq.s32.totalorder %v13, %v28
  %vm30 = vcmp.eq.s32.totalorder %v14, %v28
  %v31 = vsel %vm29, 1.0, 0.0
  %v32 = vsel %vm30, 1.0, 0.0
  %v33 = vadd.f32 %v23, %v31
  %v34 = vadd.f32 %v24, %v32
  %v35 = vlaneseq
  %v36 = vshrl.u32 %v35, 7
  %v37 = vsub.s32 2, %v36
  %v38 = vrot.slane %v11, %v37
  %vm39 = vcmp.eq.s32.totalorder %v13, %v38
  %vm40 = vcmp.eq.s32.totalorder %v14, %v38
  %v41 = vsel %vm39, 1.0, 0.0
  %v42 = vsel %vm40, 1.0, 0.0
  %v43 = vadd.f32 %v33, %v41
  %v44 = vadd.f32 %v34, %v42
  %v45 = vlaneseq
  %v46 = vshrl.u32 %v45, 7
  %v47 = vsub.s32 3, %v46
  %v48 = vrot.slane %v11, %v47
  %vm49 = vcmp.eq.s32.totalorder %v13, %v48
  %vm50 = vcmp.eq.s32.totalorder %v14, %v48
  %v51 = vsel %vm49, 1.0, 0.0
  %v52 = vsel %vm50, 1.0, 0.0
  %v53 = vadd.f32 %v43, %v51
  %v54 = vadd.f32 %v44, %v52
  %v55 = vlaneseq
  %v56 = vshrl.u32 %v55, 7
  %v57 = vsub.s32 4, %v56
  %v58 = vrot.slane %v11, %v57
  %vm59 = vcmp.eq.s32.totalorder %v13, %v58
  %vm60 = vcmp.eq.s32.totalorder %v14, %v58
  %v61 = vsel %vm59, 1.0, 0.0
  %v62 = vsel %vm60, 1.0, 0.0
  %v63 = vadd.f32 %v53, %v61
  %v64 = vadd.f32 %v54, %v62
  %v65 = vlaneseq
  %v66 = vshrl.u32 %v65, 7
  %v67 = vsub.s32 5, %v66
  %v68 = vrot.slane %v11, %v67
  %vm69 = vcmp.eq.s32.totalorder %v13, %v68
  %vm70 = vcmp.eq.s32.totalorder %v14, %v68
  %v71 = vsel %vm69, 1.0, 0.0
  %v72 = vsel %vm70, 1.0, 0.0
  %v73 = vadd.f32 %v63, %v71
  %v74 = vadd.f32 %v64, %v72
  %v75 = vmul.f32 %v73, 0.16666667
  %v76 = vmul.f32 %v74, 0.16666667
  %v77 = vld [vmem:[%s1] sm:$0xff]
  %v78 = vld [vmem:[%s1 + $0x8] sm:$0xff]
  %vm79 = vcmask 80896
  %v81 = vsel %vm79, %v77, 0
  %v84 = vsel %vm79, %v78, 0
  %vm86 = vcmask 1041408
  %v88 = vsel %vm86, %v76, 0
  %90 = vmatprep.subr.mxu0 0.0
  %91 = vmatpush1.msra.mxu0 %v75
  %92 = vmatprep.subr.mxu0 0.0
  %93 = vmatpush1.msra.mxu0 %v88
  %94 = vmatprep.subr.mxu0 0.0
  %95 = vmatpush1.msra.mxu0 0.0
  %96 = vmatprep.subr.mxu0 0.0
  %97 = vmatpush1.msra.mxu0 0.0
  %98 = vmatprep.subr.mxu0 0.0
  %99 = vmatpush1.msra.mxu0 0.0
  %100 = vmatprep.subr.mxu0 0.0
  %101 = vmatpush1.msra.mxu0 0.0
  %102 = vmatprep.subr.mxu0 0.0
  %103 = vmatpush1.msra.mxu0 0.0
  %104 = vmatprep.subr.mxu0 0.0
  %105 = vmatpush1.msra.mxu0 0.0
  %106 = vmatprep.subr.mxu0 0.0
  %107 = vmatpush1.msra.mxu0 0.0
  %108 = vmatprep.subr.mxu0 0.0
  %109 = vmatpush1.msra.mxu0 0.0
  %110 = vmatprep.subr.mxu0 0.0
  %111 = vmatpush1.msra.mxu0 0.0
  %112 = vmatprep.subr.mxu0 0.0
  %113 = vmatpush1.msra.mxu0 0.0
  %114 = vmatprep.subr.mxu0 0.0
  %115 = vmatpush1.msra.mxu0 0.0
  %116 = vmatprep.subr.mxu0 0.0
  %117 = vmatpush1.msra.mxu0 0.0
  %118 = vmatprep.subr.mxu0 0.0
  %119 = vmatpush1.msra.mxu0 0.0
  %120 = vmatprep.subr.mxu0 0.0
  %121 = vmatpush1.msra.mxu0 0.0
  %122 = vmatprep.subr.mxu0 0.0
  %123 = vmatpush1.msra.mxu0 0.0
  %124 = vmatprep.subr.mxu0 0.0
  %125 = vmatpush1.msra.mxu0 0.0
  %126 = vmatprep.subr.mxu0 0.0
  %127 = vmatpush1.msra.mxu0 0.0
  %128 = vmatprep.subr.mxu0 0.0
  %129 = vmatpush1.msra.mxu0 0.0
  %130 = vmatprep.subr.mxu0 0.0
  %131 = vmatpush1.msra.mxu0 0.0
  %132 = vmatprep.subr.mxu0 0.0
  %133 = vmatpush1.msra.mxu0 0.0
  %134 = vmatprep.subr.mxu0 0.0
  %135 = vmatpush1.msra.mxu0 0.0
  %136 = vmatprep.subr.mxu0 0.0
  %137 = vmatpush1.msra.mxu0 0.0
  %138 = vmatprep.subr.mxu0 0.0
  %139 = vmatpush1.msra.mxu0 0.0
  %140 = vmatprep.subr.mxu0 0.0
  %141 = vmatpush1.msra.mxu0 0.0
  %142 = vmatprep.subr.mxu0 0.0
  %143 = vmatpush1.msra.mxu0 0.0
  %144 = vmatprep.subr.mxu0 0.0
  %145 = vmatpush1.msra.mxu0 0.0
  %146 = vmatprep.subr.mxu0 0.0
  %147 = vmatpush1.msra.mxu0 0.0
  %148 = vmatprep.subr.mxu0 0.0
  %149 = vmatpush1.msra.mxu0 0.0
  %150 = vmatprep.subr.mxu0 0.0
  %151 = vmatpush1.msra.mxu0 0.0
  %152 = vmatprep.subr.mxu0 0.0
  %153 = vmatpush1.msra.mxu0 0.0
  %154 = vmatprep.mubr.f32.mxu0 0.0
  %155 = vmatmul.mubr.f32.gmra.mrb[0].mxu0 %v81
  %v156 = vpop.f32.mrb[0].mxu0
  %v157 = vadd.f32 0.0, %v156
  %v158 = vpop.f32.mrb[0].mxu0
  %159 = vmatprep.mubr.f32.mxu0 0.0
  %160 = vmatmul.mubr.f32.gmra.mrb[0].mxu0 %v84
  %v161 = vpop.f32.mrb[0].mxu0
  %v162 = vadd.f32 0.0, %v161
  %v163 = vpop.f32.mrb[0].mxu0
  %164 = vdwg.mxu0
  %165 = vst [vmem:[%s2] sm:$0xff] %v157
  %166 = vst [vmem:[%s2 + $0x8] sm:$0xff] %v162
  // Predicated region
  $region10: #{_digit_embedding_batched_impl.1} parent=0 // pred_check
    _
  $region11: #{_digit_embedding_batched_impl.1} parent=0 // pred_check_branch
    %168 = sbr.rel (0) target = $region13
  $region12: #{_digit_embedding_batched_impl.1} parent=0 // pred_region
    _
  $region13: #{_digit_embedding_batched_impl.1} parent=0 // pred_fallthru
    _
  // Predicated region
  $region14: #{_digit_embedding_batched_impl.1} parent=0 // pred_check
    _
  $region15: #{_digit_embedding_batched_impl.1} parent=0 // pred_check_branch
    %170 = sbr.rel (0) target = $region17
  $region16: #{_digit_embedding_batched_impl.1} parent=0 // pred_region
    _
  $region17: #{_digit_embedding_batched_impl.1} parent=0 // pred_fallthru
    _

</llo_original>
